<compile_context>
chip_gen: v5e
topology: v5e:2x2
jax: 0.10.0
libtpu: 0.0.40
codegen_flags: <defaults>
</compile_context>

<pallas_src>
import jax
import jax.numpy as jnp
from jax.experimental import pallas as pl
from jax.experimental.pallas import tpu as pltpu

_LANE = 512                  # lane-dense last dim (multiple of 128)
_MAX_BLOCK_BYTES = 4 << 20   # 4 MiB per (input or output) buffer
_VMEM_LIMIT_BYTES = 40 << 20  # covers 2x double-buffered 4 MiB tiles + headroom


def relunet_kernel(w_ref, x_ref, o_ref):
    # w_ref: (4,) f32 in SMEM: [w1a, w1b, w2a, w2b]
    # x_ref / o_ref: (block_rows, _LANE) tiles in VMEM (native dtype)
    x = x_ref[...].astype(jnp.float32)
    w1a = w_ref[0]
    w1b = w_ref[1]
    w2a = w_ref[2]
    w2b = w_ref[3]
    y = w2a * jnp.maximum(w1a * x, 0.0) + w2b * jnp.maximum(w1b * x, 0.0)
    o_ref[...] = y.astype(o_ref.dtype)


def _round_up(a, m):
    return -(-a // m) * m


def _choose_blocks(rows_padded, pack, itemsize):
    """Pick (block_rows, grid) for the 1-D row-block grid."""
    max_rows = max(pack, (_MAX_BLOCK_BYTES // (_LANE * itemsize)) // pack * pack)
    min_blocks = -(-rows_padded // max_rows)          # needed to respect VMEM budget
    # Aim for >= 4 grid steps so prefetch/compute/writeback overlap, when there
    # are enough rows to split; prefer an even count for v7x's 2 TensorCores.
    target = max(min_blocks, min(4, rows_padded // pack))
    if target > 1 and target % 2:
        target += 1
    block_rows = min(max_rows, _round_up(-(-rows_padded // target), pack))
    grid = -(-rows_padded // block_rows)
    return block_rows, grid


def relunet_forward(x, w1, w2):
    """x: (..., 1); w1: (2, 1) torch-style; w2: (1, 2) torch-style."""
    orig_shape = x.shape
    if not jnp.issubdtype(x.dtype, jnp.floating):
        x = x.astype(jnp.float32)
    dtype = x.dtype
    itemsize = jnp.dtype(dtype).itemsize
    pack = max(8, 32 // itemsize)   # sublane packing: f32 -> 8, bf16 -> 16, 8-bit -> 32

    flat = x.reshape(-1)
    n = flat.shape[0]

    # Weights -> 4 SMEM scalars [w1a, w1b, w2a, w2b].
    w_scal = jnp.concatenate(
        [jnp.asarray(w1, jnp.float32).reshape(-1),
         jnp.asarray(w2, jnp.float32).reshape(-1)])

    # Lane-dense (rows, _LANE) slab; rows only rounded to the sublane pack.
    rows = max(1, -(-n // _LANE))
    rows_padded = _round_up(rows, pack)
    padded_n = rows_padded * _LANE
    if padded_n != n:   # skip the extra HBM pad pass when already aligned
        flat = jnp.pad(flat, (0, padded_n - n))   # zero-pad is exact: relu(0)*w == 0
    x2d = flat.reshape(rows_padded, _LANE)

    block_rows, grid = _choose_blocks(rows_padded, pack, itemsize)

    out2d = pl.pallas_call(
        relunet_kernel,
        out_shape=jax.ShapeDtypeStruct((rows_padded, _LANE), dtype),
        grid_spec=pltpu.PrefetchScalarGridSpec(
            num_scalar_prefetch=0,
            grid=(grid,),
            in_specs=[
                pl.BlockSpec(memory_space=pltpu.SMEM),                 # weights
                pl.BlockSpec((block_rows, _LANE), lambda i: (i, 0)),   # x tile
            ],
            out_specs=pl.BlockSpec((block_rows, _LANE), lambda i: (i, 0)),
        ),
        compiler_params=pltpu.CompilerParams(
            dimension_semantics=("parallel",),
            vmem_limit_bytes=_VMEM_LIMIT_BYTES),
        cost_estimate=pl.CostEstimate(
            flops=7 * padded_n,
            transcendentals=0,
            bytes_accessed=2 * itemsize * padded_n),
    )(w_scal, x2d)

    out = out2d.reshape(-1)
    if padded_n != n:
        out = out[:n]
    return out.reshape(orig_shape)


def make_params(c: float):
    # Deterministic parameters exactly as in ReluNet.__init__
    w1 = jnp.array([[1.0], [-1.0]], dtype=jnp.float32)   # model[0].weight, shape (2, 1)
    w2 = c * jnp.ones((1, 2), dtype=jnp.float32)          # model[2].weight, shape (1, 2)
    return w1, w2


if __name__ == "__main__":
    key = jax.random.PRNGKey(0)
    c = 2.0
    w1, w2 = make_params(c)

    def ref_fn(xx):
        return jnp.maximum(xx @ w1.T, 0.0) @ w2.T   # same math as the torch forward

    # Small shape consistent with the module: batch of scalar inputs, (8, 1).
    x_small = jax.random.normal(key, (8, 1), dtype=jnp.float32)
    out_small = jax.block_until_ready(relunet_forward(x_small, w1, w2))
    assert out_small.shape == (8, 1)
    assert jnp.allclose(out_small, ref_fn(x_small), atol=1e-6)

    # Larger batch: exercises padding, the multi-step grid, and the masked
    # partial final block.
    x_big = jax.random.normal(jax.random.PRNGKey(1), (20000, 1), dtype=jnp.float32)
    out_big = jax.block_until_ready(relunet_forward(x_big, w1, w2))
    assert out_big.shape == (20000, 1)
    assert jnp.allclose(out_big, ref_fn(x_big), atol=1e-6)

    print("KERNEL_OK")
</pallas_src>

<mosaic_0001>
module attributes {stable_mosaic.version = 11 : i64} {
  func.func @relunet_kernel(%arg0: i32, %arg1: memref<4xf32, #tpu.memory_space<smem>>, %arg2: memref<8x512xf32, #tpu.memory_space<vmem>>, %arg3: memref<8x512xf32, #tpu.memory_space<vmem>>) attributes {dimension_semantics = [#tpu.dimension_semantics<parallel>], iteration_bounds = array<i64: 1>, scalar_prefetch = 0 : i64, scratch_operands = 0 : i64, tpu.core_type = #tpu.core_type<tc>, window_params = [{transform_indices = @transform_0, window_bounds = array<i64: 4>}, {transform_indices = @transform_1, window_bounds = array<i64: 8, 512>}, {transform_indices = @transform_2, window_bounds = array<i64: 8, 512>}]} {
    %c0 = arith.constant 0 : index
    %c0_0 = arith.constant 0 : index
    %0 = vector.load %arg2[%c0, %c0_0] : memref<8x512xf32, #tpu.memory_space<vmem>>, vector<8x512xf32>
    %c0_1 = arith.constant 0 : index
    %1 = memref.load %arg1[%c0_1] : memref<4xf32, #tpu.memory_space<smem>>
    %c1 = arith.constant 1 : index
    %2 = memref.load %arg1[%c1] : memref<4xf32, #tpu.memory_space<smem>>
    %c2 = arith.constant 2 : index
    %3 = memref.load %arg1[%c2] : memref<4xf32, #tpu.memory_space<smem>>
    %c3 = arith.constant 3 : index
    %4 = memref.load %arg1[%c3] : memref<4xf32, #tpu.memory_space<smem>>
    %5 = vector.broadcast %1 : f32 to vector<8x512xf32>
    %6 = arith.mulf %5, %0 : vector<8x512xf32>
    %cst = arith.constant 0.000000e+00 : f32
    %7 = vector.broadcast %cst : f32 to vector<8x512xf32>
    %8 = arith.maximumf %6, %7 : vector<8x512xf32>
    %9 = vector.broadcast %3 : f32 to vector<8x512xf32>
    %10 = arith.mulf %9, %8 : vector<8x512xf32>
    %11 = vector.broadcast %2 : f32 to vector<8x512xf32>
    %12 = arith.mulf %11, %0 : vector<8x512xf32>
    %cst_2 = arith.constant 0.000000e+00 : f32
    %13 = vector.broadcast %cst_2 : f32 to vector<8x512xf32>
    %14 = arith.maximumf %12, %13 : vector<8x512xf32>
    %15 = vector.broadcast %4 : f32 to vector<8x512xf32>
    %16 = arith.mulf %15, %14 : vector<8x512xf32>
    %17 = arith.addf %10, %16 : vector<8x512xf32>
    %c0_3 = arith.constant 0 : index
    %c0_4 = arith.constant 0 : index
    %18 = vector.load %arg3[%c0_3, %c0_4] : memref<8x512xf32, #tpu.memory_space<vmem>>, vector<8x512xf32>
    tpu.vector_store %arg3[%c0_3, %c0_4], %17 {strides = array<i32>} : memref<8x512xf32, #tpu.memory_space<vmem>>, vector<8x512xf32>,
    return
  }
  func.func @transform_0(%arg0: i32) -> i32 {
    %c0_i32 = arith.constant 0 : i32
    %c0_i32_0 = arith.constant 0 : i32
    return %c0_i32 : i32
  }
  func.func @transform_1(%arg0: i32) -> (i32, i32) {
    %c0_i32 = arith.constant 0 : i32
    %c0_i32_0 = arith.constant 0 : i32
    return %arg0, %c0_i32 : i32, i32
  }
  func.func @transform_2(%arg0: i32) -> (i32, i32) {
    %c0_i32 = arith.constant 0 : i32
    %c0_i32_0 = arith.constant 0 : i32
    return %arg0, %c0_i32 : i32, i32
  }
}

</mosaic_0001>

<llo_original>
// kernel: tpu_custom_call.1
$region0: #{tpu_custom_call.1}
  #allocation0 [shape = 'u32[]', space=smem, size = 0x4, offset = 0x4, fixed_abs, tag = 'smem constant byte address 0x4 - core index']
  #allocation1 [shape = 'u32[72,128]{1,0:T(1,128)}', space=vmem, size = 0x9000, scoped, tag = 'internal scratch']
  %s0 = inlined_call_operand.hbm [shape: f32[4], index: 0, kind: input, shape index: {}]
  %s1 = inlined_call_operand.hbm [shape: f32[8,512], index: 1, kind: input, shape index: {}]
  %s2 = inlined_call_operand.hbm [shape: f32[8,512], index: 2, kind: output, shape index: {}]
  %s3 = sld [smem:[#allocation0]]
  $region26: #{tpu_custom_call.1} parent=0
    _
  %s5 = ssub.s32 1, %s3
  %s6 = scalar_select 0, %s5, %s3
  $region1: #{tpu_custom_call.1} parent=0
    #allocation2 [shape = 'u8[512]{0}', space=smem, size = 0x200, scoped, tag = 'input window, operand 0, single buffered']
    #allocation3 [shape = 's32[1]{0}', space=sflag, size = 0x4, scoped, tag = 'scoped memory for tpu_custom_call.1']
    #allocation4 [shape = 's32[1]{0}', space=sflag, size = 0x4, scoped, tag = 'scoped memory for tpu_custom_call.1']
    #allocation5 [shape = 's32[1]{0}', space=sflag, size = 0x4, scoped, tag = 'scoped memory for tpu_custom_call.1']
    #allocation6 [shape = 'u8[16384]{0}', space=vmem, size = 0x4000, scoped, tag = 'input window, operand 1, single buffered']
    #allocation7 [shape = 'u8[16384]{0}', space=vmem, size = 0x4000, scoped, tag = 'output window, operand 0, single buffered']
    %7 = vsyncpa [#allocation5], 0
    %8 = vsyncpa [#allocation3], 0
    %9 = vsyncpa [#allocation4], 0
    // Predicated region
    $region2: #{tpu_custom_call.1} parent=1 // pred_check
      _
    $region3: #{tpu_custom_call.1} parent=1 // pred_check_branch
      %11 = sbr.rel (0) target = $region5
    $region4: #{tpu_custom_call.1} parent=1 // pred_region
      %13 = vsyncadd [#allocation5], 0
      %s15 = sshll.u32 %s0, 4
      %s16 = int_to_ptr.hbm [resolvable:$true] %s15
      %18 = dma.hbm_to_smem %s16, 16, [#allocation2], [#allocation5]
    $region5: #{tpu_custom_call.1} parent=1 // pred_fallthru
      _
    // Predicated region
    $region6: #{tpu_custom_call.1} parent=1 // pred_check
      _
    $region7: #{tpu_custom_call.1} parent=1 // pred_check_branch
      %20 = sbr.rel (0) target = $region9
    $region8: #{tpu_custom_call.1} parent=1 // pred_region
      %22 = vsyncadd [#allocation3], 0
      %s24 = sshll.u32 %s1, 4
      %s25 = int_to_ptr.hbm [resolvable:$true] %s24
      %s26 = sshll.u32 [#allocation6], 4
      %s27 = int_to_ptr.vmem [resolvable:$true] %s26
      %29 = dma.hbm_to_vmem [thread:$0]  %s25, 512, %s27, [#allocation3]
    $region9: #{tpu_custom_call.1} parent=1 // pred_fallthru
      _
    // Predicated region
    $region10: #{tpu_custom_call.1} parent=1 // pred_check
      _
    $region11: #{tpu_custom_call.1} parent=1 // pred_check_branch
      %31 = sbr.rel (0) target = $region13
    $region12: #{tpu_custom_call.1} parent=1 // pred_region
      %33 = dma.done [#allocation5], 16
    $region13: #{tpu_custom_call.1} parent=1 // pred_fallthru
      _
    // Predicated region
    $region14: #{tpu_custom_call.1} parent=1 // pred_check
      _
    $region15: #{tpu_custom_call.1} parent=1 // pred_check_branch
      %35 = sbr.rel (0) target = $region17
    $region16: #{tpu_custom_call.1} parent=1 // pred_region
      %37 = dma.done [#allocation3], 512
    $region17: #{tpu_custom_call.1} parent=1 // pred_fallthru
      _
    %38 = sfence
    %v39 = vld [vmem:[#allocation6] sm:$0xff]
    %v40 = vld [vmem:[#allocation6 + $0x8] sm:$0xff]
    %v41 = vld [vmem:[#allocation6 + $0x10] sm:$0xff]
    %v42 = vld [vmem:[#allocation6 + $0x18] sm:$0xff]
    %s43 = sld [smem:[#allocation2]]
    %s44 = sld [smem:[#allocation2 + $0x1]]
    %s45 = sld [smem:[#allocation2 + $0x2]]
    %s46 = sld [smem:[#allocation2 + $0x3]]
    %v47 = vstv %s43
    %v48 = vmul.f32 %v47, %v39
    %v49 = vmul.f32 %v47, %v40
    %v50 = vmul.f32 %v47, %v41
    %v51 = vmul.f32 %v47, %v42
    %v52 = vmax.f32 %v48, 0.0
    %v53 = vmax.f32 %v49, 0.0
    %v54 = vmax.f32 %v50, 0.0
    %v55 = vmax.f32 %v51, 0.0
    %v56 = vstv %s45
    %v57 = vmul.f32 %v56, %v52
    %v58 = vmul.f32 %v56, %v53
    %v59 = vmul.f32 %v56, %v54
    %v60 = vmul.f32 %v56, %v55
    %v61 = vstv %s44
    %v62 = vmul.f32 %v61, %v39
    %v63 = vmul.f32 %v61, %v40
    %v64 = vmul.f32 %v61, %v41
    %v65 = vmul.f32 %v61, %v42
    %v66 = vmax.f32 %v62, 0.0
    %v67 = vmax.f32 %v63, 0.0
    %v68 = vmax.f32 %v64, 0.0
    %v69 = vmax.f32 %v65, 0.0
    %v70 = vstv %s46
    %v71 = vmul.f32 %v70, %v66
    %v72 = vmul.f32 %v70, %v67
    %v73 = vmul.f32 %v70, %v68
    %v74 = vmul.f32 %v70, %v69
    %v75 = vadd.f32 %v57, %v71
    %v76 = vadd.f32 %v58, %v72
    %v77 = vadd.f32 %v59, %v73
    %v78 = vadd.f32 %v60, %v74
    %79 = vst [vmem:[#allocation7] sm:$0xff] %v75
    %80 = vst [vmem:[#allocation7 + $0x8] sm:$0xff] %v76
    %81 = vst [vmem:[#allocation7 + $0x10] sm:$0xff] %v77
    %82 = vst [vmem:[#allocation7 + $0x18] sm:$0xff] %v78
    // Predicated region
    $region18: #{tpu_custom_call.1} parent=1 // pred_check
      _
    $region19: #{tpu_custom_call.1} parent=1 // pred_check_branch
      %84 = sbr.rel (0) target = $region21
    $region20: #{tpu_custom_call.1} parent=1 // pred_region
      %86 = vsyncadd [#allocation4], 0
      %s88 = sshll.u32 [#allocation7], 4
      %s89 = int_to_ptr.vmem [resolvable:$true] %s88
      %s90 = sshll.u32 %s2, 4
      %s91 = int_to_ptr.hbm [resolvable:$true] %s90
      %93 = dma.vmem_to_hbm [thread:$0]  %s89, 512, %s91, [#allocation4]
    $region21: #{tpu_custom_call.1} parent=1 // pred_fallthru
      _
    // Predicated region
    $region22: #{tpu_custom_call.1} parent=1 // pred_check
      _
    $region23: #{tpu_custom_call.1} parent=1 // pred_check_branch
      %95 = sbr.rel (0) target = $region25
    $region24: #{tpu_custom_call.1} parent=1 // pred_region
      %97 = dma.done [#allocation4], 512
    $region25: #{tpu_custom_call.1} parent=1 // pred_fallthru
      _
    %98 = vsyncpa [#allocation3], 1
    %99 = vsyncpa [#allocation4], 1
    %100 = vsyncpa [#allocation5], 1

</llo_original>
